<compile_context>
chip_gen: v5e
topology: v5e:2x2
jax: 0.10.0
libtpu: 0.0.40
codegen_flags: <defaults>
</compile_context>

<pallas_src>
import functools

import jax
import jax.numpy as jnp
from jax.experimental import pallas as pl
from jax.experimental.pallas import tpu as pltpu


# --------------------------------------------------------------------------- #
# Init-time helper (amortized across forwards; prefix/suffix are frozen buffers).
# --------------------------------------------------------------------------- #
def make_prompt_template(token_prefix, token_suffix, n_ctx):
    """Pre-assemble the frozen rows of every prompt once.

    Returns (n_cls, P, L, D) with token_prefix in row 0, zeros in rows
    [1, 1+n_ctx) (the hole the learnable ctx is written into every forward) and
    token_suffix in rows [1+n_ctx, L).
    """
    n_cls, p, _, d = token_prefix.shape
    dtype = token_prefix.dtype
    hole = jnp.zeros((n_cls, p, n_ctx, d), dtype)
    return jnp.concatenate([token_prefix, hole, token_suffix], axis=2)


# --------------------------------------------------------------------------- #
# Kernel: write only the ctx rows of the (aliased) prompt buffer.
# --------------------------------------------------------------------------- #
def _ctx_write_kernel(ctx_ref, tmpl_ref, out_ref, bcast_ref, sem_ref):
    """Every non-ctx row comes from the aliased template and is never touched."""
    del tmpl_ref  # present only to establish the input/output alias
    c = pl.program_id(0)
    nc = pl.num_programs(0)
    c_blk, _, n_ctx, _ = bcast_ref.shape
    n_cls = out_ref.shape[0]

    # Fill the broadcast slab once: c_blk stacked copies of ctx, (c_blk, P, n_ctx, D).
    @pl.when(c == 0)
    def _():
        bcast_ref[...] = jnp.broadcast_to(
            ctx_ref[...].astype(bcast_ref.dtype)[None], bcast_ref.shape)

    def ctx_rows_copy(ci, slot):
        # Clamp the last block instead of a ragged tail; overlapped classes are
        # rewritten with identical bytes (the ctx payload is class-independent),
        # so the brief overlap of the final two DMAs is harmless.
        start = jnp.minimum(ci * c_blk, n_cls - c_blk)
        dst = out_ref.at[pl.ds(start, c_blk), :, pl.ds(1, n_ctx), :]
        return pltpu.make_async_copy(bcast_ref, dst, sem_ref.at[slot])

    # Issue this step's write, retire the previous one (<=2 writes in flight).
    ctx_rows_copy(c, c % 2).start()

    @pl.when(c > 0)
    def _():
        ctx_rows_copy(c - 1, (c - 1) % 2).wait()

    @pl.when(c == nc - 1)
    def _():
        ctx_rows_copy(c, c % 2).wait()


# --------------------------------------------------------------------------- #
# Generation-aware tiling.
# --------------------------------------------------------------------------- #
def _plan_tiles(n_cls, p, n_ctx, d, out_itemsize, class_block=None):
    """Pick the class-block size and the scoped-VMEM limit for this chip."""
    try:
        vmem_cap = int(pltpu.get_tpu_info().vmem_capacity_bytes)
    except Exception:  # conservative fallback = v7x (64 MiB per TensorCore)
        vmem_cap = 64 * 1024 * 1024
    hard_cap = min((vmem_cap * 3) // 4, 96 * 1024 * 1024)  # <=48MiB v7x, <=96MiB v5e/v6e

    sub = 8 * max(1, 4 // out_itemsize)            # sublane rows per 32-bit pack
    pad_rows = -(-n_ctx // sub) * sub
    pad_lanes = -(-d // 128) * 128
    per_class = p * pad_rows * pad_lanes * out_itemsize        # broadcast slab / class
    fixed = 2 * p * pad_rows * pad_lanes * 4 + (4 << 20)       # ctx block (dbl-buf) + slack

    budget = max(hard_cap - fixed, per_class)
    c_blk = int(max(1, min(n_cls, budget // per_class)))
    if class_block is not None:
        c_blk = int(max(1, min(c_blk, class_block)))
    vmem_limit = int(min(hard_cap, max(32 * 1024 * 1024, c_blk * per_class + fixed)))
    return c_blk, vmem_limit


# --------------------------------------------------------------------------- #
# Forward.
# --------------------------------------------------------------------------- #
def nega_prompt_forward(ctx_positive, ctx_negative, prompt_template,
                        modify_to_ori=None, class_block=None):
    """NegaPromptLearner.forward.

    ctx_positive    : (1, n_ctx, D)          learnable positive context
    ctx_negative    : (n_nega_ctx, n', D)    learnable negative contexts (n' <= n_ctx)
    prompt_template : (n_cls, P, L, D)       from make_prompt_template (P = 1+n_nega_ctx)
    returns         : (n_cls', P, L, D)      full prompts

    The template is aliased to the output; pass it through jax.jit(donate_argnums=...)
    to update it in place.  The returned prompts are themselves a valid template for
    the next call (ctx rows are fully overwritten, frozen rows untouched).
    """
    n_ctx = ctx_positive.shape[1]
    d = ctx_positive.shape[-1]

    # --- per-branch context stack (P, n_ctx, D), exactly as the PyTorch code --- #
    if ctx_negative.shape[0] == 0:
        ctx_all = ctx_positive
    else:
        diff = n_ctx - ctx_negative.shape[1]
        assert diff >= 0, "ctx_negative has more context rows than ctx_positive"
        if diff > 0:
            pad = jnp.zeros((ctx_negative.shape[0], diff, d), ctx_negative.dtype)
            ctx_negative = jnp.concatenate([pad, ctx_negative], axis=1)  # pad at FRONT
        ctx_all = jnp.concatenate([ctx_positive, ctx_negative], axis=0)

    if modify_to_ori is not None:
        # TODO(synk): class remap gathers the whole template (off the zero-copy fast
        # path); relies on dict insertion order exactly like the PyTorch code.
        ori = jnp.asarray(list(modify_to_ori.values()), dtype=jnp.int32)
        prompt_template = prompt_template[ori]

    n_cls, p, seq_len, d_t = prompt_template.shape
    assert d_t == d, "ctx dim mismatch between ctx vectors and template"
    assert ctx_all.shape[0] == p, (
        f"branch mismatch: ctx has {ctx_all.shape[0]} branches, template has {p}")
    assert 1 + n_ctx <= seq_len, "template too short for prefix + ctx rows"
    out_dtype = prompt_template.dtype
    out_itemsize = jnp.dtype(out_dtype).itemsize

    c_blk, vmem_limit = _plan_tiles(n_cls, p, n_ctx, d, out_itemsize, class_block)
    n_steps = pl.cdiv(n_cls, c_blk)

    bytes_accessed = (ctx_all.size * jnp.dtype(ctx_all.dtype).itemsize
                      + n_cls * p * n_ctx * d * out_itemsize)

    return pl.pallas_call(
        _ctx_write_kernel,
        out_shape=jax.ShapeDtypeStruct((n_cls, p, seq_len, d), out_dtype),
        grid_spec=pltpu.PrefetchScalarGridSpec(
            num_scalar_prefetch=0,
            grid=(n_steps,),
            in_specs=[
                # learnable ctx: tiny, constant index map => one DMA, VMEM-resident
                pl.BlockSpec((p, n_ctx, d), lambda c: (0, 0, 0)),
                # frozen template: stays in HBM, aliased to the output buffer
                pl.BlockSpec(memory_space=pl.ANY),
            ],
            out_specs=pl.BlockSpec(memory_space=pl.ANY),
            scratch_shapes=[
                pltpu.VMEM((c_blk, p, n_ctx, d), out_dtype),   # broadcast slab
                pltpu.SemaphoreType.DMA((2,)),                 # 2-deep write pipeline
            ],
        ),
        input_output_aliases={1: 0},   # template -> prompts (in place)
        compiler_params=pltpu.CompilerParams(
            dimension_semantics=("arbitrary",),
            vmem_limit_bytes=vmem_limit,
        ),
        cost_estimate=pl.CostEstimate(flops=0, transcendentals=0,
                                      bytes_accessed=int(bytes_accessed)),
    )(ctx_all, prompt_template)


# TODO(synk): forward_negative() can reuse the same kernel by passing a
# negative-only ctx stack and a template built from the matching branch slices.


# --------------------------------------------------------------------------- #
# Pure-jnp reference mirroring the PyTorch forward().
# --------------------------------------------------------------------------- #
def _reference_forward(ctx_positive, ctx_negative, token_prefix, token_suffix):
    n_cls = token_prefix.shape[0]
    n_ctx = ctx_positive.shape[1]
    d = ctx_positive.shape[-1]
    if ctx_negative.shape[0] == 0:
        ctx = ctx_positive
    else:
        diff = n_ctx - ctx_negative.shape[1]
        if diff > 0:
            pad = jnp.zeros((ctx_negative.shape[0], diff, d), ctx_negative.dtype)
            ctx_negative = jnp.concatenate([pad, ctx_negative], axis=1)
        ctx = jnp.concatenate([ctx_positive, ctx_negative], axis=0)
    ctx = jnp.broadcast_to(ctx[None], (n_cls,) + ctx.shape).astype(token_prefix.dtype)
    return jnp.concatenate([token_prefix, ctx, token_suffix], axis=2)


if __name__ == "__main__":
    # Small synthetic configuration consistent with the module.
    n_cls = 6          # number of class names (non-multiple of the block -> clamp path)
    n_ctx = 4          # cfg.TRAINER.COOP.N_CTX
    n_nega_ctx = 2     # cfg.TRAINER.COOP.NEGA_CTX
    ctx_dim = 128      # clip_model.ln_final.weight.shape[0]
    seq_len = 16       # tokenized prompt length (CLIP uses 77; small here)
    P = 1 + n_nega_ctx
    suf_len = seq_len - 1 - n_ctx
    dtype = jnp.float32

    key = jax.random.PRNGKey(0)
    k1, k2, k3, k4 = jax.random.split(key, 4)

    # nn.init.normal_(ctx_vectors, std=0.02) equivalent (deterministic).
    ctx_positive = 0.02 * jax.random.normal(k1, (1, n_ctx, ctx_dim), dtype)
    ctx_negative = 0.02 * jax.random.normal(k2, (n_nega_ctx, n_ctx, ctx_dim), dtype)

    # TODO(synk): clip.tokenize / _Tokenizer / clip_model.token_embedding from
    # __init__ have no Pallas equivalent; frozen embeddings are synthesized instead.
    token_prefix = jax.random.normal(k3, (n_cls, P, 1, ctx_dim), dtype)
    token_suffix = jax.random.normal(k4, (n_cls, P, suf_len, ctx_dim), dtype)

    # Init-time template (amortized across all forwards).
    template = make_prompt_template(token_prefix, token_suffix, n_ctx)

    # class_block=4 forces a 2-step grid here so the pipelined DMA path is exercised.
    fwd = jax.jit(functools.partial(nega_prompt_forward, class_block=4),
                  donate_argnums=(2,))
    prompts = jax.block_until_ready(fwd(ctx_positive, ctx_negative, template))

    ref = _reference_forward(ctx_positive, ctx_negative, token_prefix, token_suffix)
    assert prompts.shape == (n_cls, P, seq_len, ctx_dim), prompts.shape
    assert jnp.allclose(prompts, ref), "mismatch vs reference"
    print("KERNEL_OK")
</pallas_src>

<mosaic_0001>
module attributes {stable_mosaic.version = 11 : i64} {
  func.func @_ctx_write_kernel(%arg0: i32, %arg1: memref<3x4x128xf32, #tpu.memory_space<vmem>>, %arg2: memref<6x3x16x128xf32, #tpu.memory_space<any>>, %arg3: memref<6x3x16x128xf32, #tpu.memory_space<any>>, %arg4: memref<4x3x4x128xf32, #tpu.memory_space<vmem>>, %arg5: memref<2x!tpu.dma_semaphore, #tpu.memory_space<semaphore_mem>>) attributes {dimension_semantics = [#tpu.dimension_semantics<arbitrary>], iteration_bounds = array<i64: 2>, scalar_prefetch = 0 : i64, scratch_operands = 2 : i64, tpu.core_type = #tpu.core_type<tc>, window_params = [{pipeline_mode = #tpu.pipeline_mode<synchronous>, transform_indices = @transform_0, window_bounds = array<i64: 3, 4, 128>}, {}, {}]} {
    %c0_i32 = arith.constant 0 : i32
    %0 = arith.cmpi eq, %arg0, %c0_i32 : i32
    %1 = arith.extui %0 : i1 to i32
    %c0_i32_0 = arith.constant 0 : i32
    %2 = arith.cmpi ne, %1, %c0_i32_0 : i32
    scf.if %2 {
      %c0 = arith.constant 0 : index
      %c0_13 = arith.constant 0 : index
      %c0_14 = arith.constant 0 : index
      %24 = vector.load %arg1[%c0, %c0_13, %c0_14] : memref<3x4x128xf32, #tpu.memory_space<vmem>>, vector<3x4x128xf32>
      %25 = vector.shape_cast %24 : vector<3x4x128xf32> to vector<1x3x4x128xf32>
      %26 = vector.shape_cast %25 : vector<1x3x4x128xf32> to vector<1x3x4x128xf32>
      %27 = vector.broadcast %26 : vector<1x3x4x128xf32> to vector<4x3x4x128xf32>
      %c0_15 = arith.constant 0 : index
      %c0_16 = arith.constant 0 : index
      %c0_17 = arith.constant 0 : index
      %c0_18 = arith.constant 0 : index
      %28 = vector.load %arg4[%c0_15, %c0_16, %c0_17, %c0_18] : memref<4x3x4x128xf32, #tpu.memory_space<vmem>>, vector<4x3x4x128xf32>
      tpu.vector_store %arg4[%c0_15, %c0_16, %c0_17, %c0_18], %27 {strides = array<i32>} : memref<4x3x4x128xf32, #tpu.memory_space<vmem>>, vector<4x3x4x128xf32>,
    } else {
    }
    %c2_i32 = arith.constant 2 : i32
    %c0_i32_1 = arith.constant 0 : i32
    %3 = arith.cmpi eq, %c2_i32, %c0_i32_1 : i32
    %c1_i32 = arith.constant 1 : i32
    %4 = arith.select %3, %c1_i32, %c2_i32 : i32
    %5 = arith.remsi %arg0, %4 : i32
    %c0_i32_2 = arith.constant 0 : i32
    %6 = arith.cmpi ne, %5, %c0_i32_2 : i32
    %c0_i32_3 = arith.constant 0 : i32
    %7 = arith.cmpi slt, %5, %c0_i32_3 : i32
    %c0_i32_4 = arith.constant 0 : i32
    %8 = arith.cmpi slt, %4, %c0_i32_4 : i32
    %9 = arith.xori %7, %8 : i1
    %10 = arith.andi %9, %6 : i1
    %11 = arith.addi %5, %4 : i32
    %12 = arith.select %10, %11, %5 : i32
    %c4_i32 = arith.constant 4 : i32
    %13 = arith.muli %arg0, %c4_i32 : i32
    %c2_i32_5 = arith.constant 2 : i32
    %14 = arith.minsi %13, %c2_i32_5 : i32
    %c0_i32_6 = arith.constant 0 : i32
    %c1_i32_7 = arith.constant 1 : i32
    %c0_i32_8 = arith.constant 0 : i32
    %15 = tpu.memref_slice %arg3[%14, %c0_i32_6, %c1_i32_7, %c0_i32_8] : memref<6x3x16x128xf32, #tpu.memory_space<any>> -> memref<4x3x4x128xf32, #tpu.memory_space<any>>
    %16 = tpu.memref_slice %arg5[%12] : memref<2x!tpu.dma_semaphore, #tpu.memory_space<semaphore_mem>> -> memref<1x!tpu.dma_semaphore, #tpu.memory_space<semaphore_mem>>
    %17 = tpu.memref_squeeze %16 : memref<1x!tpu.dma_semaphore, #tpu.memory_space<semaphore_mem>> -> memref<!tpu.dma_semaphore, #tpu.memory_space<semaphore_mem>>
    tpu.enqueue_dma source(%arg4 : memref<4x3x4x128xf32, #tpu.memory_space<vmem>>) target(%15 : memref<4x3x4x128xf32, #tpu.memory_space<any>>) target_semaphore(%17 : memref<!tpu.dma_semaphore, #tpu.memory_space<semaphore_mem>>)
    %c0_i32_9 = arith.constant 0 : i32
    %18 = arith.cmpi sgt, %arg0, %c0_i32_9 : i32
    %19 = arith.extui %18 : i1 to i32
    %c0_i32_10 = arith.constant 0 : i32
    %20 = arith.cmpi ne, %19, %c0_i32_10 : i32
    scf.if %20 {
      %c1_i32_13 = arith.constant 1 : i32
      %24 = arith.subi %arg0, %c1_i32_13 : i32
      %c1_i32_14 = arith.constant 1 : i32
      %25 = arith.subi %arg0, %c1_i32_14 : i32
      %c2_i32_15 = arith.constant 2 : i32
      %c0_i32_16 = arith.constant 0 : i32
      %26 = arith.cmpi eq, %c2_i32_15, %c0_i32_16 : i32
      %c1_i32_17 = arith.constant 1 : i32
      %27 = arith.select %26, %c1_i32_17, %c2_i32_15 : i32
      %28 = arith.remsi %25, %27 : i32
      %c0_i32_18 = arith.constant 0 : i32
      %29 = arith.cmpi ne, %28, %c0_i32_18 : i32
      %c0_i32_19 = arith.constant 0 : i32
      %30 = arith.cmpi slt, %28, %c0_i32_19 : i32
      %c0_i32_20 = arith.constant 0 : i32
      %31 = arith.cmpi slt, %27, %c0_i32_20 : i32
      %32 = arith.xori %30, %31 : i1
      %33 = arith.andi %32, %29 : i1
      %34 = arith.addi %28, %27 : i32
      %35 = arith.select %33, %34, %28 : i32
      %c4_i32_21 = arith.constant 4 : i32
      %36 = arith.muli %24, %c4_i32_21 : i32
      %c2_i32_22 = arith.constant 2 : i32
      %37 = arith.minsi %36, %c2_i32_22 : i32
      %c0_i32_23 = arith.constant 0 : i32
      %c1_i32_24 = arith.constant 1 : i32
      %c0_i32_25 = arith.constant 0 : i32
      %38 = tpu.memref_slice %arg3[%37, %c0_i32_23, %c1_i32_24, %c0_i32_25] : memref<6x3x16x128xf32, #tpu.memory_space<any>> -> memref<4x3x4x128xf32, #tpu.memory_space<any>>
      %39 = tpu.memref_slice %arg5[%35] : memref<2x!tpu.dma_semaphore, #tpu.memory_space<semaphore_mem>> -> memref<1x!tpu.dma_semaphore, #tpu.memory_space<semaphore_mem>>
      %40 = tpu.memref_squeeze %39 : memref<1x!tpu.dma_semaphore, #tpu.memory_space<semaphore_mem>> -> memref<!tpu.dma_semaphore, #tpu.memory_space<semaphore_mem>>
      tpu.wait_dma2 semaphore(%40 : memref<!tpu.dma_semaphore, #tpu.memory_space<semaphore_mem>>) src(%arg4 : memref<4x3x4x128xf32, #tpu.memory_space<vmem>>) dst(%38 : memref<4x3x4x128xf32, #tpu.memory_space<any>>)
    } else {
    }
    %c1_i32_11 = arith.constant 1 : i32
    %21 = arith.cmpi eq, %arg0, %c1_i32_11 : i32
    %22 = arith.extui %21 : i1 to i32
    %c0_i32_12 = arith.constant 0 : i32
    %23 = arith.cmpi ne, %22, %c0_i32_12 : i32
    scf.if %23 {
      %c2_i32_13 = arith.constant 2 : i32
      %c0_i32_14 = arith.constant 0 : i32
      %24 = arith.cmpi eq, %c2_i32_13, %c0_i32_14 : i32
      %c1_i32_15 = arith.constant 1 : i32
      %25 = arith.select %24, %c1_i32_15, %c2_i32_13 : i32
      %26 = arith.remsi %arg0, %25 : i32
      %c0_i32_16 = arith.constant 0 : i32
      %27 = arith.cmpi ne, %26, %c0_i32_16 : i32
      %c0_i32_17 = arith.constant 0 : i32
      %28 = arith.cmpi slt, %26, %c0_i32_17 : i32
      %c0_i32_18 = arith.constant 0 : i32
      %29 = arith.cmpi slt, %25, %c0_i32_18 : i32
      %30 = arith.xori %28, %29 : i1
      %31 = arith.andi %30, %27 : i1
      %32 = arith.addi %26, %25 : i32
      %33 = arith.select %31, %32, %26 : i32
      %c4_i32_19 = arith.constant 4 : i32
      %34 = arith.muli %arg0, %c4_i32_19 : i32
      %c2_i32_20 = arith.constant 2 : i32
      %35 = arith.minsi %34, %c2_i32_20 : i32
      %c0_i32_21 = arith.constant 0 : i32
      %c1_i32_22 = arith.constant 1 : i32
      %c0_i32_23 = arith.constant 0 : i32
      %36 = tpu.memref_slice %arg3[%35, %c0_i32_21, %c1_i32_22, %c0_i32_23] : memref<6x3x16x128xf32, #tpu.memory_space<any>> -> memref<4x3x4x128xf32, #tpu.memory_space<any>>
      %37 = tpu.memref_slice %arg5[%33] : memref<2x!tpu.dma_semaphore, #tpu.memory_space<semaphore_mem>> -> memref<1x!tpu.dma_semaphore, #tpu.memory_space<semaphore_mem>>
      %38 = tpu.memref_squeeze %37 : memref<1x!tpu.dma_semaphore, #tpu.memory_space<semaphore_mem>> -> memref<!tpu.dma_semaphore, #tpu.memory_space<semaphore_mem>>
      tpu.wait_dma2 semaphore(%38 : memref<!tpu.dma_semaphore, #tpu.memory_space<semaphore_mem>>) src(%arg4 : memref<4x3x4x128xf32, #tpu.memory_space<vmem>>) dst(%36 : memref<4x3x4x128xf32, #tpu.memory_space<any>>)
    } else {
    }
    return
  }
  func.func @transform_0(%arg0: i32) -> (i32, i32, i32) {
    %c0_i32 = arith.constant 0 : i32
    %c0_i32_0 = arith.constant 0 : i32
    %c0_i32_1 = arith.constant 0 : i32
    %c0_i32_2 = arith.constant 0 : i32
    return %c0_i32, %c0_i32_0, %c0_i32_1 : i32, i32, i32
  }
}

</mosaic_0001>

<llo_original>
// kernel: nega_prompt_forward.1
$region0: #{nega_prompt_forward.1}
  #allocation0 [shape = 'u32[]', space=smem, size = 0x4, offset = 0x4, fixed_abs, tag = 'smem constant byte address 0x4 - core index']
  #allocation1 [shape = 'u32[72,128]{1,0:T(1,128)}', space=vmem, size = 0x9000, scoped, tag = 'internal scratch']
  #allocation2 [shape = 'f32[4,3,4,128]{3,2,1,0:T(4,128)}', space=vmem, size = 0x6000, scoped, tag = 'scratch operand']
  #allocation3 [shape = 's32[2]{0}', space=sflag, size = 0x8, scoped, tag = 'scratch operand']
  #allocation4 [shape = 's32[]', space=sflag, size = 0x4, offset = 0, fixed_abs, tag = 'sflag constant byte address 0x0 - dummy sync flag']
  %s0 = inlined_call_operand.vmem [shape: f32[3,4,128], index: 0, kind: input, shape index: {}]
  %s1 = inlined_call_operand.hbm [shape: f32[6,3,16,128], index: 1, kind: input, shape index: {}, may-alias: {1,2}]
  %s2 = inlined_call_operand.hbm [shape: f32[6,3,16,128], index: 2, kind: output, shape index: {}, may-alias: {1,2}]
  %s3 = sld [smem:[#allocation0]]
  $region37: #{nega_prompt_forward.1} parent=0
    _
  %s5 = ssub.s32 1, %s3
  %s6 = scalar_select 0, %s5, %s3
  loop: start=0, step=1, limit=3
  $region2: #{nega_prompt_forward.1} parent=0 // loop_pre_header
    _
  $region3: #{nega_prompt_forward.1} parent=0 // loop_header
    %s8 = sphi 0, %s12
    %p9 = scmp.ge.s32.totalorder %s8, 3
    %s15 = sphi 0, %s15
    %s17 = sphi 0, %s15
    %s25 = sphi 0, %s17
  $region4: #{nega_prompt_forward.1} parent=0 // loop_header_branch
    %11 = sbr.rel (%p9) target = $region8
  $region5: #{nega_prompt_forward.1} parent=0 // loop_body
    %s13 = ssub.s32 %s8, 1
    %s14 = sadd.s32 %s8, 1
    %s16 = sadd.s32 %s15, 1
    %p18 = scmp.eq.s32.totalorder %s8, 1
    %p19 = scmp.ne.s32.totalorder %s15, %s17
    %p20 = scmp.eq.s32.totalorder %s8, 0
    %p21 = por %p19, %p20
    %p22 = scmp.ne.s32.totalorder %s15, %s17
    %p23 = scmp.eq.s32.totalorder %s13, 1
    %p24 = por %p22, %p23
    %p26 = scmp.ne.s32.totalorder %s17, %s25
    %p27 = scmp.eq.s32.totalorder %s13, 0
    %p28 = por %p26, %p27
    %p29 = scmp.le.s32.totalorder 1, %s8
    // Predicated region
    $region9: #{nega_prompt_forward.1} parent=5 // pred_check
      %p30 = pneg %p29
    $region10: #{nega_prompt_forward.1} parent=5 // pred_check_branch
      %32 = sbr.rel (%p30) target = $region12
    $region11: #{nega_prompt_forward.1} parent=5 // pred_region
      %s33 = ssub.s32 %s8, 1
      // Predicated region
      $region13: #{nega_prompt_forward.1} parent=11 // pred_check
        %p34 = pneg %p28
      $region14: #{nega_prompt_forward.1} parent=11 // pred_check_branch
        %36 = sbr.rel (%p34) target = $region16
      $region15: #{nega_prompt_forward.1} parent=11 // pred_region
        _
      $region16: #{nega_prompt_forward.1} parent=11 // pred_fallthru
        _
    $region12: #{nega_prompt_forward.1} parent=5 // pred_fallthru
      _
    %p37 = scmp.lt.s32.totalorder %s8, 2
    // Predicated region
    $region17: #{nega_prompt_forward.1} parent=5 // pred_check
      %p38 = pneg %p37
    $region18: #{nega_prompt_forward.1} parent=5 // pred_check_branch
      %40 = sbr.rel (%p38) target = $region20
    $region19: #{nega_prompt_forward.1} parent=5 // pred_region
      _
    $region20: #{nega_prompt_forward.1} parent=5 // pred_fallthru
      _
    %p41 = scmp.le.s32.totalorder 1, %s8
    // Predicated region
    $region21: #{nega_prompt_forward.1} parent=5 // pred_check
      %p42 = pneg %p41
    $region22: #{nega_prompt_forward.1} parent=5 // pred_check_branch
      %44 = sbr.rel (%p42) target = $region24
    $region23: #{nega_prompt_forward.1} parent=5 // pred_region
      %s45 = ssub.s32 %s8, 1
      %p46 = pneg %p28
      %p47 = pneg %p24
      %p48 = scmp.eq.s32.totalorder %s13, 0
      // Predicated region
      $region25: #{nega_prompt_forward.1} parent=23 // pred_check
        %p49 = pneg %p48
      $region26: #{nega_prompt_forward.1} parent=23 // pred_check_branch
        %51 = sbr.rel (%p49) target = $region28
      $region27: #{nega_prompt_forward.1} parent=23 // pred_region
        %v52 = vld [vmem:[%s0] sm:$0xf]
        %v53 = vld [vmem:[%s0 + $0x4] sm:$0xf]
        %v54 = vld [vmem:[%s0 + $0x8] sm:$0xf]
        %55 = vst [vmem:[#allocation2] sm:$0xf] %v52
        %56 = vst [vmem:[#allocation2 + $0x4] sm:$0xf] %v53
        %57 = vst [vmem:[#allocation2 + $0x8] sm:$0xf] %v54
        %58 = vst [vmem:[#allocation2 + $0xc] sm:$0xf] %v52
        %59 = vst [vmem:[#allocation2 + $0x10] sm:$0xf] %v53
        %60 = vst [vmem:[#allocation2 + $0x14] sm:$0xf] %v54
        %61 = vst [vmem:[#allocation2 + $0x18] sm:$0xf] %v52
        %62 = vst [vmem:[#allocation2 + $0x1c] sm:$0xf] %v53
        %63 = vst [vmem:[#allocation2 + $0x20] sm:$0xf] %v54
        %64 = vst [vmem:[#allocation2 + $0x24] sm:$0xf] %v52
        %65 = vst [vmem:[#allocation2 + $0x28] sm:$0xf] %v53
        %66 = vst [vmem:[#allocation2 + $0x2c] sm:$0xf] %v54
      $region28: #{nega_prompt_forward.1} parent=23 // pred_fallthru
        _
      %p67 = scmp.lt.s32.totalorder %s13, 0
      %s68 = ssub.s32 0, %s13
      %s69 = scalar_select %p67, %s68, %s13
      %s70 = sand.u32 %s69, 1
      %s71 = ssub.s32 0, %s70
      %s72 = scalar_select %p67, %s71, %s70
      %p73 = scmp.ne.s32.totalorder %s72, 0
      %p74 = scmp.lt.s32.totalorder %s72, 0
      %p75 = pnand %p74, %p73
      %p76 = pneg %p75
      %s77 = sadd.s32 %s72, 2
      %s78 = scalar_select %p76, %s77, %s72
      %s79 = smul.u32 %s13, 4
      %p80 = scmp.lt.s32.totalorder %s79, 2
      %s81 = scalar_select %p80, %s79, 2
      %s82 = smul.u32 %s81, 48
      %s83 = sadd.s32 1, %s82
      %s84 = scalar_lea.hbm %s2, %s83
      %s85 = scalar_lea.sflag [#allocation3], %s78
      %s86 = sshll.u32 [#allocation2], 4
      %s87 = int_to_ptr.vmem [resolvable:$true] %s86
      %s88 = sshll.u32 %s84, 4
      %s89 = int_to_ptr.hbm [resolvable:$true] %s88
      %93 = dma.vmem_to_hbm [thread:$0]  %s87, 768, %s89, %s85, 64, 256, 4
      %p94 = scmp.gt.s32.totalorder %s13, 0
      // Predicated region
      $region29: #{nega_prompt_forward.1} parent=23 // pred_check
        %p95 = pneg %p94
      $region30: #{nega_prompt_forward.1} parent=23 // pred_check_branch
        %97 = sbr.rel (%p95) target = $region32
      $region31: #{nega_prompt_forward.1} parent=23 // pred_region
        %s98 = ssub.s32 %s13, 1
        %p99 = scmp.lt.s32.totalorder %s98, 0
        %s100 = ssub.s32 0, %s98
        %s101 = scalar_select %p99, %s100, %s98
        %s102 = sand.u32 %s101, 1
        %s103 = ssub.s32 0, %s102
        %s104 = scalar_select %p99, %s103, %s102
        %p105 = scmp.ne.s32.totalorder %s104, 0
        %p106 = scmp.lt.s32.totalorder %s104, 0
        %p107 = pnand %p106, %p105
        %p108 = pneg %p107
        %s109 = sadd.s32 %s104, 2
        %s110 = scalar_select %p108, %s109, %s104
        %s111 = scalar_lea.sflag [#allocation3], %s110
        %s112 = smul.u32 4, 3
        %s113 = smul.u32 %s112, 4
        %s114 = smul.u32 %s113, 1
        %s115 = sshll.u32 %s114, 4
        %116 = dma.done %s111, %s115
      $region32: #{nega_prompt_forward.1} parent=23 // pred_fallthru
        _
      %p117 = scmp.eq.s32.totalorder %s13, 1
      // Predicated region
      $region33: #{nega_prompt_forward.1} parent=23 // pred_check
        %p118 = pneg %p117
      $region34: #{nega_prompt_forward.1} parent=23 // pred_check_branch
        %120 = sbr.rel (%p118) target = $region36
      $region35: #{nega_prompt_forward.1} parent=23 // pred_region
        %s121 = smul.u32 4, 3
        %s122 = smul.u32 %s121, 4
        %s123 = smul.u32 %s122, 1
        %s124 = sshll.u32 %s123, 4
        %125 = dma.done %s85, %s124
      $region36: #{nega_prompt_forward.1} parent=23 // pred_fallthru
        _
    $region24: #{nega_prompt_forward.1} parent=5 // pred_fallthru
      _
  $region6: #{nega_prompt_forward.1} parent=0 // loop_footer
    %s12 = sadd.s32 1, %s8
  $region7: #{nega_prompt_forward.1} parent=0 // loop_footer_branch
    %7 = sbr.rel target = $region3
  $region8: #{nega_prompt_forward.1} parent=0 // loop_exit
    _
  %126 = vsyncmov [#allocation3]
  %s127 = vpop.sfrf %126
  %p128 = scmp.eq.s32.totalorder %s127, 0
  %p129 = pneg %p128
  %131 = shalt.err (%p129)
  %s132 = scalar_lea.sflag [#allocation3], 1
  %133 = vsyncmov %s132
  %s134 = vpop.sfrf %133
  %p135 = scmp.eq.s32.totalorder %s134, 0
  %p136 = pneg %p135
  %138 = shalt.err (%p136)

</llo_original>
